<compile_context>
chip_gen: v6e
topology: v6e:2x2x1
jax: 0.10.0
libtpu: 0.0.40
codegen_flags: <defaults>
</compile_context>

<pallas_src>
import jax
import jax.numpy as jnp
from jax.experimental import pallas as pl
from jax.experimental.pallas import tpu as pltpu


def _dice_kernel(kept_ref, p_ref, t_ref, inter_ref, den_ref):
    """One grid step = one (class, batch, row-tile) tile.

    kept_ref  : SMEM (C_kept,) i32 -- kept-class index map (scalar prefetch,
                                      only used by the index_maps)
    p_ref     : VMEM (TR, 128)     -- predict logits tile
    t_ref     : VMEM (TR, 128)     -- target tile
    inter_ref : VMEM (1, 128) f32  -- per-class lane-partial sum of p*t
    den_ref   : VMEM (1, 128) f32  -- per-class lane-partial sum of p*p + t*t
    """
    del kept_ref  # consumed by the index maps only
    n = pl.program_id(1)
    r = pl.program_id(2)

    @pl.when((n == 0) & (r == 0))
    def _():
        inter_ref[...] = jnp.zeros_like(inter_ref)
        den_ref[...] = jnp.zeros_like(den_ref)

    p = jax.nn.sigmoid(p_ref[...].astype(jnp.float32))
    t = t_ref[...].astype(jnp.float32)
    inter_ref[...] += jnp.sum(p * t, axis=0, keepdims=True)
    den_ref[...] += jnp.sum(p * p + t * t, axis=0, keepdims=True)


def _pick_tr(rt, itemsize, tr_max=512):
    """Pick a row-tile size TR that divides rt and respects dtype sublane tiling."""
    if rt <= tr_max:
        return rt  # full extent along that axis is always a legal block
    mult = max(8, 32 // int(itemsize))  # 8 for f32, 16 for bf16, 32 for int8/fp8
    tr = (tr_max // mult) * mult
    while tr >= mult:
        if rt % tr == 0:
            return tr
        tr -= mult
    # TODO(synk): no aligned divisor; fall back to a single block over the axis.
    return rt


def dice_loss(predict, target, *, smooth=0.0, weights=None, ignore_index=None,
              tr_max=512):
    """Multiclass Dice loss matching the PyTorch DiceLoss.forward semantics."""
    if predict.shape != target.shape:
        raise ValueError("predict and target shape do not match")
    N, C, H, W = predict.shape
    if (H * W) % 128 != 0:
        # TODO(synk): pad + mask the spatial remainder for arbitrary H*W.
        raise ValueError("H*W must be a multiple of 128 for this kernel")
    RT = (H * W) // 128

    if weights is not None:
        if weights.shape[0] != C:
            raise ValueError(f"Expect weights shape [{C}], get[{weights.shape[0]}]")

    if ignore_index is not None and 0 <= int(ignore_index) < C:
        kept = [i for i in range(C) if i != int(ignore_index)]
    else:
        kept = list(range(C))
    c_kept = len(kept)
    if c_kept == 0:
        return jnp.float32(0.0)
    kept_arr = jnp.asarray(kept, dtype=jnp.int32)

    # Free, contiguous reshape (no transpose / HBM copy).
    p4 = predict.reshape(N, C, RT, 128)
    t4 = target.reshape(N, C, RT, 128)

    itemsize = max(jnp.dtype(predict.dtype).itemsize,
                   jnp.dtype(target.dtype).itemsize)
    TR = _pick_tr(RT, itemsize, tr_max)
    r_tiles = RT // TR

    in_block = (pl.Squeezed(), pl.Squeezed(), TR, 128)

    def in_index_map(c, n, r, kept_ref):
        # Ignored class is never fetched: remap kept-class index -> real class.
        return (n, kept_ref[c], r, 0)

    def out_index_map(c, n, r, kept_ref):
        # Resident per-class accumulator across the (n, r) reduction axes.
        return (c, 0, 0)

    inter, den = pl.pallas_call(
        _dice_kernel,
        out_shape=(
            jax.ShapeDtypeStruct((c_kept, 1, 128), jnp.float32),
            jax.ShapeDtypeStruct((c_kept, 1, 128), jnp.float32),
        ),
        grid_spec=pltpu.PrefetchScalarGridSpec(
            num_scalar_prefetch=1,
            grid=(c_kept, N, r_tiles),
            in_specs=[
                pl.BlockSpec(in_block, in_index_map),
                pl.BlockSpec(in_block, in_index_map),
            ],
            out_specs=[
                pl.BlockSpec((pl.Squeezed(), 1, 128), out_index_map),
                pl.BlockSpec((pl.Squeezed(), 1, 128), out_index_map),
            ],
        ),
        compiler_params=pltpu.CompilerParams(
            dimension_semantics=("parallel", "arbitrary", "arbitrary"),
        ),
    )(kept_arr, p4, t4)

    # Tiny epilogue: final lane reduce, smoothing, weighting, division by C.
    inter_c = jnp.sum(inter, axis=(1, 2))            # (c_kept,)
    den_c = jnp.sum(den, axis=(1, 2))                # (c_kept,)
    smooth_f = jnp.float32(smooth)
    loss_c = 1.0 - (2.0 * inter_c + smooth_f) / (den_c + smooth_f)
    if weights is not None:
        loss_c = loss_c * weights.astype(jnp.float32)[kept_arr]
    return jnp.sum(loss_c) / C


def _reference(predict, target, *, smooth=0.0, weights=None, ignore_index=None):
    """Pure-JAX reference mirroring the PyTorch code (for sanity check)."""
    C = target.shape[1]
    p = jax.nn.sigmoid(predict.astype(jnp.float32))
    t = target.astype(jnp.float32)
    total = jnp.float32(0.0)
    for i in range(C):
        if i == ignore_index:
            continue
        pi, ti = p[:, i], t[:, i]
        inter = jnp.sum(pi * ti)
        den = jnp.sum(pi * pi) + jnp.sum(ti * ti)
        li = 1.0 - (2.0 * inter + smooth) / (den + smooth)
        if weights is not None:
            li = li * weights[i]
        total = total + li
    return total / C


if __name__ == "__main__":
    key = jax.random.PRNGKey(0)
    k1, k2, k3 = jax.random.split(key, 3)

    N, C, H, W = 2, 4, 16, 16
    predict = jax.random.normal(k1, (N, C, H, W), dtype=jnp.float32)
    target = (jax.random.uniform(k2, (N, C, H, W)) > 0.5).astype(jnp.float32)
    weights = jax.random.uniform(k3, (C,), dtype=jnp.float32)

    # weights + smooth + ignore_index
    loss = dice_loss(predict, target, smooth=1.0, weights=weights, ignore_index=2)
    loss = jax.block_until_ready(loss)
    ref = _reference(predict, target, smooth=1.0, weights=weights, ignore_index=2)
    assert jnp.allclose(loss, ref, rtol=1e-5, atol=1e-5), (loss, ref)

    # defaults (smooth=0, no weights, no ignore_index)
    loss2 = jax.block_until_ready(dice_loss(predict, target))
    ref2 = _reference(predict, target)
    assert jnp.allclose(loss2, ref2, rtol=1e-5, atol=1e-5), (loss2, ref2)

    # bf16 inputs (half the HBM bytes); in-kernel math stays f32.
    p_bf16 = predict.astype(jnp.bfloat16)
    t_bf16 = target.astype(jnp.bfloat16)
    loss3 = jax.block_until_ready(
        dice_loss(p_bf16, t_bf16, smooth=1.0, weights=weights, ignore_index=2))
    ref3 = _reference(p_bf16.astype(jnp.float32), t_bf16.astype(jnp.float32),
                      smooth=1.0, weights=weights, ignore_index=2)
    assert jnp.allclose(loss3, ref3, rtol=1e-4, atol=1e-4), (loss3, ref3)

    print("KERNEL_OK")
</pallas_src>

<mosaic_0001>
module attributes {stable_mosaic.version = 11 : i64} {
  func.func @_dice_kernel(%arg0: i32, %arg1: i32, %arg2: i32, %arg3: memref<3xi32, #tpu.memory_space<smem>>, %arg4: memref<1x1x2x128xf32, #tpu.memory_space<vmem>>, %arg5: memref<1x1x2x128xf32, #tpu.memory_space<vmem>>, %arg6: memref<1x1x128xf32, #tpu.memory_space<vmem>>, %arg7: memref<1x1x128xf32, #tpu.memory_space<vmem>>) attributes {dimension_semantics = [#tpu.dimension_semantics<parallel>, #tpu.dimension_semantics<arbitrary>, #tpu.dimension_semantics<arbitrary>], iteration_bounds = array<i64: 3, 2, 1>, scalar_prefetch = 1 : i64, scratch_operands = 0 : i64, tpu.core_type = #tpu.core_type<tc>, window_params = [{transform_indices = @transform_0, window_bounds = array<i64: 1, 1, 2, 128>}, {transform_indices = @transform_1, window_bounds = array<i64: 1, 1, 2, 128>}, {transform_indices = @transform_2, window_bounds = array<i64: 1, 1, 128>}, {transform_indices = @transform_3, window_bounds = array<i64: 1, 1, 128>}]} {
    %c0_i32 = arith.constant 0 : i32
    %0 = arith.cmpi eq, %arg1, %c0_i32 : i32
    %c0_i32_0 = arith.constant 0 : i32
    %1 = arith.cmpi eq, %arg2, %c0_i32_0 : i32
    %2 = arith.andi %0, %1 : i1
    %3 = arith.extui %2 : i1 to i32
    %c0_i32_1 = arith.constant 0 : i32
    %4 = arith.cmpi ne, %3, %c0_i32_1 : i32
    scf.if %4 {
      %cst_23 = arith.constant 0.000000e+00 : f32
      %34 = vector.broadcast %cst_23 : f32 to vector<1x128xf32>
      %c0_24 = arith.constant 0 : index
      %c0_25 = arith.constant 0 : index
      %c0_26 = arith.constant 0 : index
      %35 = vector.load %arg6[%c0_24, %c0_25, %c0_26] : memref<1x1x128xf32, #tpu.memory_space<vmem>>, vector<1x1x128xf32>
      %36 = vector.shape_cast %35 : vector<1x1x128xf32> to vector<1x128xf32>
      %37 = vector.shape_cast %34 : vector<1x128xf32> to vector<1x1x128xf32>
      tpu.vector_store %arg6[%c0_24, %c0_25, %c0_26], %37 {strides = array<i32>} : memref<1x1x128xf32, #tpu.memory_space<vmem>>, vector<1x1x128xf32>,
      %cst_27 = arith.constant 0.000000e+00 : f32
      %38 = vector.broadcast %cst_27 : f32 to vector<1x128xf32>
      %c0_28 = arith.constant 0 : index
      %c0_29 = arith.constant 0 : index
      %c0_30 = arith.constant 0 : index
      %39 = vector.load %arg7[%c0_28, %c0_29, %c0_30] : memref<1x1x128xf32, #tpu.memory_space<vmem>>, vector<1x1x128xf32>
      %40 = vector.shape_cast %39 : vector<1x1x128xf32> to vector<1x128xf32>
      %41 = vector.shape_cast %38 : vector<1x128xf32> to vector<1x1x128xf32>
      tpu.vector_store %arg7[%c0_28, %c0_29, %c0_30], %41 {strides = array<i32>} : memref<1x1x128xf32, #tpu.memory_space<vmem>>, vector<1x1x128xf32>,
    } else {
    }
    %c0 = arith.constant 0 : index
    %c0_2 = arith.constant 0 : index
    %c0_3 = arith.constant 0 : index
    %c0_4 = arith.constant 0 : index
    %5 = vector.load %arg4[%c0, %c0_2, %c0_3, %c0_4] : memref<1x1x2x128xf32, #tpu.memory_space<vmem>>, vector<1x1x2x128xf32>
    %6 = vector.shape_cast %5 : vector<1x1x2x128xf32> to vector<2x128xf32>
    %7 = arith.negf %6 : vector<2x128xf32>
    %8 = math.exp %7 : vector<2x128xf32>
    %cst = arith.constant 1.000000e+00 : f32
    %9 = vector.broadcast %cst : f32 to vector<2x128xf32>
    %10 = arith.addf %9, %8 : vector<2x128xf32>
    %11 = arith.divf %9, %10 : vector<2x128xf32>
    %c0_5 = arith.constant 0 : index
    %c0_6 = arith.constant 0 : index
    %c0_7 = arith.constant 0 : index
    %c0_8 = arith.constant 0 : index
    %12 = vector.load %arg5[%c0_5, %c0_6, %c0_7, %c0_8] : memref<1x1x2x128xf32, #tpu.memory_space<vmem>>, vector<1x1x2x128xf32>
    %13 = vector.shape_cast %12 : vector<1x1x2x128xf32> to vector<2x128xf32>
    %c0_9 = arith.constant 0 : index
    %c0_10 = arith.constant 0 : index
    %c0_11 = arith.constant 0 : index
    %14 = vector.load %arg6[%c0_9, %c0_10, %c0_11] : memref<1x1x128xf32, #tpu.memory_space<vmem>>, vector<1x1x128xf32>
    %15 = vector.shape_cast %14 : vector<1x1x128xf32> to vector<1x128xf32>
    %16 = arith.mulf %11, %13 : vector<2x128xf32>
    %cst_12 = arith.constant dense<0.000000e+00> : vector<128xf32>
    %17 = vector.multi_reduction <add>, %16, %cst_12 [0] : vector<2x128xf32> to vector<128xf32>
    %18 = vector.shape_cast %17 : vector<128xf32> to vector<1x128xf32>
    %19 = arith.addf %15, %18 : vector<1x128xf32>
    %c0_13 = arith.constant 0 : index
    %c0_14 = arith.constant 0 : index
    %c0_15 = arith.constant 0 : index
    %20 = vector.load %arg6[%c0_13, %c0_14, %c0_15] : memref<1x1x128xf32, #tpu.memory_space<vmem>>, vector<1x1x128xf32>
    %21 = vector.shape_cast %20 : vector<1x1x128xf32> to vector<1x128xf32>
    %22 = vector.shape_cast %19 : vector<1x128xf32> to vector<1x1x128xf32>
    tpu.vector_store %arg6[%c0_13, %c0_14, %c0_15], %22 {strides = array<i32>} : memref<1x1x128xf32, #tpu.memory_space<vmem>>, vector<1x1x128xf32>,
    %c0_16 = arith.constant 0 : index
    %c0_17 = arith.constant 0 : index
    %c0_18 = arith.constant 0 : index
    %23 = vector.load %arg7[%c0_16, %c0_17, %c0_18] : memref<1x1x128xf32, #tpu.memory_space<vmem>>, vector<1x1x128xf32>
    %24 = vector.shape_cast %23 : vector<1x1x128xf32> to vector<1x128xf32>
    %25 = arith.mulf %11, %11 : vector<2x128xf32>
    %26 = arith.mulf %13, %13 : vector<2x128xf32>
    %27 = arith.addf %25, %26 : vector<2x128xf32>
    %cst_19 = arith.constant dense<0.000000e+00> : vector<128xf32>
    %28 = vector.multi_reduction <add>, %27, %cst_19 [0] : vector<2x128xf32> to vector<128xf32>
    %29 = vector.shape_cast %28 : vector<128xf32> to vector<1x128xf32>
    %30 = arith.addf %24, %29 : vector<1x128xf32>
    %c0_20 = arith.constant 0 : index
    %c0_21 = arith.constant 0 : index
    %c0_22 = arith.constant 0 : index
    %31 = vector.load %arg7[%c0_20, %c0_21, %c0_22] : memref<1x1x128xf32, #tpu.memory_space<vmem>>, vector<1x1x128xf32>
    %32 = vector.shape_cast %31 : vector<1x1x128xf32> to vector<1x128xf32>
    %33 = vector.shape_cast %30 : vector<1x128xf32> to vector<1x1x128xf32>
    tpu.vector_store %arg7[%c0_20, %c0_21, %c0_22], %33 {strides = array<i32>} : memref<1x1x128xf32, #tpu.memory_space<vmem>>, vector<1x1x128xf32>,
    return
  }
  func.func @transform_0(%arg0: i32, %arg1: i32, %arg2: i32, %arg3: memref<3xi32, #tpu.memory_space<smem>>) -> (i32, i32, i32, i32) {
    %0 = arith.index_cast %arg0 : i32 to index
    %1 = memref.load %arg3[%0] : memref<3xi32, #tpu.memory_space<smem>>
    %c0_i32 = arith.constant 0 : i32
    %c0_i32_0 = arith.constant 0 : i32
    return %arg1, %1, %arg2, %c0_i32 : i32, i32, i32, i32
  }
  func.func @transform_1(%arg0: i32, %arg1: i32, %arg2: i32, %arg3: memref<3xi32, #tpu.memory_space<smem>>) -> (i32, i32, i32, i32) {
    %0 = arith.index_cast %arg0 : i32 to index
    %1 = memref.load %arg3[%0] : memref<3xi32, #tpu.memory_space<smem>>
    %c0_i32 = arith.constant 0 : i32
    %c0_i32_0 = arith.constant 0 : i32
    return %arg1, %1, %arg2, %c0_i32 : i32, i32, i32, i32
  }
  func.func @transform_2(%arg0: i32, %arg1: i32, %arg2: i32, %arg3: memref<3xi32, #tpu.memory_space<smem>>) -> (i32, i32, i32) {
    %c0_i32 = arith.constant 0 : i32
    %c0_i32_0 = arith.constant 0 : i32
    %c0_i32_1 = arith.constant 0 : i32
    return %arg0, %c0_i32, %c0_i32_0 : i32, i32, i32
  }
  func.func @transform_3(%arg0: i32, %arg1: i32, %arg2: i32, %arg3: memref<3xi32, #tpu.memory_space<smem>>) -> (i32, i32, i32) {
    %c0_i32 = arith.constant 0 : i32
    %c0_i32_0 = arith.constant 0 : i32
    %c0_i32_1 = arith.constant 0 : i32
    return %arg0, %c0_i32, %c0_i32_0 : i32, i32, i32
  }
}

</mosaic_0001>

<llo_original>
// kernel: tpu_custom_call.1
$region0: #{tpu_custom_call.1}
  #allocation0 [shape = 'u32[]', space=smem, size = 0x4, offset = 0x4, fixed_abs, tag = 'smem constant byte address 0x4 - core index']
  #allocation1 [shape = 'u32[144,128]{1,0:T(1,128)}', space=vmem, size = 0x12000, scoped, tag = 'internal scratch']
  #allocation2 [shape = 's32[1]{0}', space=sflag, size = 0x4, scoped, tag = 'scoped memory for tpu_custom_call.1']
  #allocation3 [shape = 'u8[512]{0}', space=smem, size = 0x200, scoped, tag = 'prefetched SMEM operand 0']
  %s0 = inlined_call_operand.hbm [shape: s32[3], index: 0, kind: input, shape index: {}]
  %s1 = inlined_call_operand.hbm [shape: f32[2,4,2,128], index: 1, kind: input, shape index: {}]
  %s2 = inlined_call_operand.hbm [shape: f32[2,4,2,128], index: 2, kind: input, shape index: {}]
  %s3 = inlined_call_operand.hbm [shape: f32[3,1,128], index: 3, kind: output, shape index: {0}]
  %s4 = inlined_call_operand.hbm [shape: f32[3,1,128], index: 4, kind: output, shape index: {1}]
  %5 = xla_tuple %s3, %s4
  %s6 = sld [smem:[#allocation0]]
  $region61: #{tpu_custom_call.1} parent=0
    _
  %s8 = ssub.s32 1, %s6
  %s9 = scalar_select 0, %s8, %s6
  %11 = dma.hbm_to_smem %s0, 16, [#allocation3], [#allocation2]
  %12 = dma.done [#allocation2], 16
  %13 = sfence
  $region1: #{tpu_custom_call.1} parent=0
    #allocation4 [shape = 'u8[2048]{0}', space=vmem, size = 0x800, scoped, tag = 'input window, operand 1']
    #allocation5 [shape = 's32[2]{0}', space=sflag, size = 0x8, scoped, tag = 'scoped memory for tpu_custom_call.1']
    #allocation6 [shape = 's32[2]{0}', space=sflag, size = 0x8, scoped, tag = 'scoped memory for tpu_custom_call.1']
    #allocation7 [shape = 'u8[2048]{0}', space=vmem, size = 0x800, scoped, tag = 'input window, operand 2']
    #allocation8 [shape = 's32[2]{0}', space=sflag, size = 0x8, scoped, tag = 'scoped memory for tpu_custom_call.1']
    #allocation9 [shape = 'u8[1024]{0}', space=vmem, size = 0x400, scoped, tag = 'output window, operand 0']
    #allocation10 [shape = 'u8[1024]{0}', space=vmem, size = 0x400, scoped, tag = 'output window, operand 1']
    #allocation11 [shape = 's32[2]{0}', space=sflag, size = 0x8, scoped, tag = 'scoped memory for tpu_custom_call.1']
    %14 = vsyncpa [#allocation5], 0
    %s15 = scalar_lea.sflag [#allocation5], 1
    %16 = vsyncpa %s15, 0
    %17 = vsyncpa [#allocation8], 0
    %s18 = scalar_lea.sflag [#allocation8], 1
    %19 = vsyncpa %s18, 0
    %20 = vsyncpa [#allocation6], 0
    %s21 = scalar_lea.sflag [#allocation6], 1
    %22 = vsyncpa %s21, 0
    %23 = vsyncpa [#allocation11], 0
    %s24 = scalar_lea.sflag [#allocation11], 1
    %25 = vsyncpa %s24, 0
    loop: start=0, step=1, limit=8
    $region2: #{tpu_custom_call.1} parent=1 // loop_pre_header
      _
    $region3: #{tpu_custom_call.1} parent=1 // loop_header
      %s27 = sphi 0, %s31
      %p28 = scmp.ge.s32.totalorder %s27, 8
      %s34 = sphi 0, %s53
      %s35 = sphi 0, %s49
      %s36 = sphi 0, %s45
      %s37 = sphi 0, %s34
      %s38 = sphi 0, %s35
      %s39 = sphi 0, %s36
      %s40 = sphi 0, %s37
      %s41 = sphi 0, %s38
      %s42 = sphi 0, %s39
      %s62 = sphi 0, %s64
      %s65 = sphi 0, %s62
      %s66 = sphi 0, %s65
      %s82 = sphi 0, %s66
      %s94 = sphi 0, %s96
      %s97 = sphi 0, %s94
      %s98 = sphi 0, %s97
      %s114 = sphi 0, %s98
      %s120 = sphi 0, %s122
      %s123 = sphi 0, %s120
      %s124 = sphi 0, %s123
      %s140 = sphi 0, %s124
      %s146 = sphi 0, %s148
      %s149 = sphi 0, %s146
      %s150 = sphi 0, %s149
      %s166 = sphi 0, %s150
    $region4: #{tpu_custom_call.1} parent=1 // loop_header_branch
      %30 = sbr.rel (%p28) target = $region8
    $region5: #{tpu_custom_call.1} parent=1 // loop_body
      %s32 = ssub.s32 %s27, 1
      %s33 = ssub.s32 %s27, 2
      %s43 = sadd.s32 1, %s36
      %p44 = scmp.ge.s32.totalorder %s43, 1
      %s45 = scalar_select %p44, 0, %s43
      %s46 = sadd.s32 1, %s35
      %s47 = scalar_select %p44, %s46, %s35
      %p48 = scmp.ge.s32.totalorder %s47, 2
      %s49 = scalar_select %p48, 0, %s47
      %s50 = sadd.s32 1, %s34
      %s51 = scalar_select %p48, %s50, %s34
      %p52 = scmp.ge.s32.totalorder %s51, 3
      %s53 = scalar_select %p52, 0, %s51
      %s54 = sld [smem:[#allocation3 + %s34]]
      %s55 = sld [smem:[#allocation3 + %s53]]
      %s56 = ssub.s32 %s35, %s49
      %s57 = ssub.s32 %s54, %s55
      %s58 = sor.u32 %s56, %s57
      %s59 = ssub.s32 %s36, %s45
      %s60 = sor.u32 %s58, %s59
      %p61 = scmp.eq.s32.totalorder %s60, 0
      %s63 = sadd.s32 %s62, 1
      %s64 = scalar_select %p61, %s62, %s63
      %p67 = pneg %p61
      %p68 = scmp.eq.s32.totalorder %s27, 5
      %p69 = por %p67, %p68
      %p70 = scmp.ne.s32.totalorder %s62, %s65
      %p71 = scmp.eq.s32.totalorder %s27, 0
      %p72 = por %p70, %p71
      %p73 = scmp.ne.s32.totalorder %s62, %s65
      %p74 = scmp.eq.s32.totalorder %s32, 5
      %p75 = por %p73, %p74
      %p76 = scmp.ne.s32.totalorder %s65, %s66
      %p77 = scmp.eq.s32.totalorder %s32, 0
      %p78 = por %p76, %p77
      %p79 = scmp.ne.s32.totalorder %s65, %s66
      %p80 = scmp.eq.s32.totalorder %s33, 5
      %p81 = por %p79, %p80
      %p83 = scmp.ne.s32.totalorder %s66, %s82
      %p84 = scmp.eq.s32.totalorder %s33, 0
      %p85 = por %p83, %p84
      %s86 = sld [smem:[#allocation3 + %s34]]
      %s87 = sld [smem:[#allocation3 + %s53]]
      %s88 = ssub.s32 %s35, %s49
      %s89 = ssub.s32 %s86, %s87
      %s90 = sor.u32 %s88, %s89
      %s91 = ssub.s32 %s36, %s45
      %s92 = sor.u32 %s90, %s91
      %p93 = scmp.eq.s32.totalorder %s92, 0
      %s95 = sadd.s32 %s94, 1
      %s96 = scalar_select %p93, %s94, %s95
      %p99 = pneg %p93
      %p100 = scmp.eq.s32.totalorder %s27, 5
      %p101 = por %p99, %p100
      %p102 = scmp.ne.s32.totalorder %s94, %s97
      %p103 = scmp.eq.s32.totalorder %s27, 0
      %p104 = por %p102, %p103
      %p105 = scmp.ne.s32.totalorder %s94, %s97
      %p106 = scmp.eq.s32.totalorder %s32, 5
      %p107 = por %p105, %p106
      %p108 = scmp.ne.s32.totalorder %s97, %s98
      %p109 = scmp.eq.s32.totalorder %s32, 0
      %p110 = por %p108, %p109
      %p111 = scmp.ne.s32.totalorder %s97, %s98
      %p112 = scmp.eq.s32.totalorder %s33, 5
      %p113 = por %p111, %p112
      %p115 = scmp.ne.s32.totalorder %s98, %s114
      %p116 = scmp.eq.s32.totalorder %s33, 0
      %p117 = por %p115, %p116
      %s118 = ssub.s32 %s34, %s53
      %p119 = scmp.eq.s32.totalorder %s118, 0
      %s121 = sadd.s32 %s120, 1
      %s122 = scalar_select %p119, %s120, %s121
      %p125 = pneg %p119
      %p126 = scmp.eq.s32.totalorder %s27, 5
      %p127 = por %p125, %p126
      %p128 = scmp.ne.s32.totalorder %s120, %s123
      %p129 = scmp.eq.s32.totalorder %s27, 0
      %p130 = por %p128, %p129
      %p131 = scmp.ne.s32.totalorder %s120, %s123
      %p132 = scmp.eq.s32.totalorder %s32, 5
      %p133 = por %p131, %p132
      %p134 = scmp.ne.s32.totalorder %s123, %s124
      %p135 = scmp.eq.s32.totalorder %s32, 0
      %p136 = por %p134, %p135
      %p137 = scmp.ne.s32.totalorder %s123, %s124
      %p138 = scmp.eq.s32.totalorder %s33, 5
      %p139 = por %p137, %p138
      %p141 = scmp.ne.s32.totalorder %s124, %s140
      %p142 = scmp.eq.s32.totalorder %s33, 0
      %p143 = por %p141, %p142
      %s144 = ssub.s32 %s34, %s53
      %p145 = scmp.eq.s32.totalorder %s144, 0
      %s147 = sadd.s32 %s146, 1
      %s148 = scalar_select %p145, %s146, %s147
      %p151 = pneg %p145
      %p152 = scmp.eq.s32.totalorder %s27, 5
      %p153 = por %p151, %p152
      %p154 = scmp.ne.s32.totalorder %s146, %s149
      %p155 = scmp.eq.s32.totalorder %s27, 0
      %p156 = por %p154, %p155
      %p157 = scmp.ne.s32.totalorder %s146, %s149
      %p158 = scmp.eq.s32.totalorder %s32, 5
      %p159 = por %p157, %p158
      %p160 = scmp.ne.s32.totalorder %s149, %s150
      %p161 = scmp.eq.s32.totalorder %s32, 0
      %p162 = por %p160, %p161
      %p163 = scmp.ne.s32.totalorder %s149, %s150
      %p164 = scmp.eq.s32.totalorder %s33, 5
      %p165 = por %p163, %p164
      %p167 = scmp.ne.s32.totalorder %s150, %s166
      %p168 = scmp.eq.s32.totalorder %s33, 0
      %p169 = por %p167, %p168
      %p170 = scmp.le.s32.totalorder 1, %s27
      %p171 = scmp.lt.s32.totalorder %s27, 7
      %p172 = pnand %p170, %p171
      %p173 = pneg %p172
      // Predicated region
      $region9: #{tpu_custom_call.1} parent=5 // pred_check
        _
      $region10: #{tpu_custom_call.1} parent=5 // pred_check_branch
        %175 = sbr.rel (%p172) target = $region12
      $region11: #{tpu_custom_call.1} parent=5 // pred_region
        %s176 = ssub.s32 %s27, 1
      $region12: #{tpu_custom_call.1} parent=5 // pred_fallthru
        _
      %p177 = scmp.lt.s32.totalorder %s27, 6
      // Predicated region
      $region13: #{tpu_custom_call.1} parent=5 // pred_check
        %p178 = pneg %p177
      $region14: #{tpu_custom_call.1} parent=5 // pred_check_branch
        %180 = sbr.rel (%p178) target = $region16
      $region15: #{tpu_custom_call.1} parent=5 // pred_region
        // Predicated region
        $region17: #{tpu_custom_call.1} parent=15 // pred_check
          %p181 = pneg %p72
        $region18: #{tpu_custom_call.1} parent=15 // pred_check_branch
          %183 = sbr.rel (%p181) target = $region20
        $region19: #{tpu_custom_call.1} parent=15 // pred_region
          %s184 = sand.u32 %s62, 1
          %s185 = scalar_lea.sflag [#allocation5], %s184
          %s186 = sand.u32 %s62, 1
          %s187 = smul.addr %s186, 2
          %s188 = scalar_lea.vmem [#allocation4], %s187
          %s189 = sld [smem:[#allocation3 + %s34]]
          %s191 = ssub.s32 32, 32
          %192 = vsyncadd %s185, %s191
          %s193 = sadd.s32 %s36, %s189
          %s194 = smul.addr %s35, 4
          %s195 = sadd.s32 %s193, %s194
          %s196 = smul.addr %s195, 32
          %s197 = scalar_lea.hbm %s1, %s196
          %s199 = sshll.u32 %s188, 4
          %s200 = int_to_ptr.vmem [resolvable:$true] %s199
          %202 = dma.hbm_to_vmem [thread:$0]  %s197, 32, %s200, %s185
        $region20: #{tpu_custom_call.1} parent=15 // pred_fallthru
          _
        // Predicated region
        $region21: #{tpu_custom_call.1} parent=15 // pred_check
          %p203 = pneg %p104
        $region22: #{tpu_custom_call.1} parent=15 // pred_check_branch
          %205 = sbr.rel (%p203) target = $region24
        $region23: #{tpu_custom_call.1} parent=15 // pred_region
          %s206 = sand.u32 %s94, 1
          %s207 = scalar_lea.sflag [#allocation8], %s206
          %s208 = sand.u32 %s94, 1
          %s209 = smul.addr %s208, 2
          %s210 = scalar_lea.vmem [#allocation7], %s209
          %s211 = sld [smem:[#allocation3 + %s34]]
          %s213 = ssub.s32 32, 32
          %214 = vsyncadd %s207, %s213
          %s215 = sadd.s32 %s36, %s211
          %s216 = smul.addr %s35, 4
          %s217 = sadd.s32 %s215, %s216
          %s218 = smul.addr %s217, 32
          %s219 = scalar_lea.hbm %s2, %s218
          %s221 = sshll.u32 %s210, 4
          %s222 = int_to_ptr.vmem [resolvable:$true] %s221
          %224 = dma.hbm_to_vmem [thread:$0]  %s219, 32, %s222, %s207
        $region24: #{tpu_custom_call.1} parent=15 // pred_fallthru
          _
      $region16: #{tpu_custom_call.1} parent=5 // pred_fallthru
        _
      %p225 = scmp.le.s32.totalorder 1, %s27
      %p226 = scmp.lt.s32.totalorder %s27, 7
      %p227 = pnand %p225, %p226
      %p228 = pneg %p227
      // Predicated region
      $region25: #{tpu_custom_call.1} parent=5 // pred_check
        _
      $region26: #{tpu_custom_call.1} parent=5 // pred_check_branch
        %230 = sbr.rel (%p227) target = $region28
      $region27: #{tpu_custom_call.1} parent=5 // pred_region
        %s231 = ssub.s32 %s27, 1
        %s232 = sand.u32 %s65, 1
        %s233 = scalar_lea.sflag [#allocation5], %s232
        %s234 = sand.u32 %s65, 1
        %s235 = smul.addr %s234, 2
        %s236 = scalar_lea.vmem [#allocation4], %s235
        // Predicated region
        $region29: #{tpu_custom_call.1} parent=27 // pred_check
          %p237 = pneg %p78
        $region30: #{tpu_custom_call.1} parent=27 // pred_check_branch
          %239 = sbr.rel (%p237) target = $region32
        $region31: #{tpu_custom_call.1} parent=27 // pred_region
          %240 = dma.done %s233, 32
        $region32: #{tpu_custom_call.1} parent=27 // pred_fallthru
          _
        %s241 = sand.u32 %s97, 1
        %s242 = scalar_lea.sflag [#allocation8], %s241
        %s243 = sand.u32 %s97, 1
        %s244 = smul.addr %s243, 2
        %s245 = scalar_lea.vmem [#allocation7], %s244
        // Predicated region
        $region33: #{tpu_custom_call.1} parent=27 // pred_check
          %p246 = pneg %p110
        $region34: #{tpu_custom_call.1} parent=27 // pred_check_branch
          %248 = sbr.rel (%p246) target = $region36
        $region35: #{tpu_custom_call.1} parent=27 // pred_region
          %249 = dma.done %s242, 32
        $region36: #{tpu_custom_call.1} parent=27 // pred_fallthru
          _
        %s250 = sand.u32 %s65, 1
        %s251 = scalar_lea.sflag [#allocation5], %s250
        %s252 = sand.u32 %s65, 1
        %s253 = smul.addr %s252, 2
        %s254 = scalar_lea.vmem [#allocation4], %s253
        %p255 = pneg %p78
        %p256 = pneg %p75
        %s257 = sand.u32 %s97, 1
        %s258 = scalar_lea.sflag [#allocation8], %s257
        %s259 = sand.u32 %s97, 1
        %s260 = smul.addr %s259, 2
        %s261 = scalar_lea.vmem [#allocation7], %s260
        %p262 = pneg %p110
        %p263 = pneg %p107
        %p264 = pneg %p136
        %p265 = pneg %p133
        %s266 = sand.u32 %s123, 1
        %s267 = scalar_lea.sflag [#allocation6], %s266
        %s268 = sand.u32 %s123, 1
        %s269 = scalar_lea.vmem [#allocation9], %s268
        %p270 = pneg %p162
        %p271 = pneg %p159
        %s272 = sand.u32 %s149, 1
        %s273 = scalar_lea.sflag [#allocation11], %s272
        %s274 = sand.u32 %s149, 1
        %s275 = scalar_lea.vmem [#allocation10], %s274
        %s276 = sld [smem:[#allocation3 + %s37]]
        %s277 = sld [smem:[#allocation3 + %s37]]
        %p278 = scmp.eq.s32.totalorder %s38, 0
        %p279 = scmp.eq.s32.totalorder %s39, 0
        %p280 = pnand %p278, %p279
        %p281 = pneg %p280
        // Predicated region
        $region37: #{tpu_custom_call.1} parent=27 // pred_check
          _
        $region38: #{tpu_custom_call.1} parent=27 // pred_check_branch
          %283 = sbr.rel (%p280) target = $region40
        $region39: #{tpu_custom_call.1} parent=27 // pred_region
          %284 = vst [vmem:[%s269] sm:$0x1] 0.0
          %285 = vst [vmem:[%s275] sm:$0x1] 0.0
        $region40: #{tpu_custom_call.1} parent=27 // pred_fallthru
          _
        %v286 = vld [vmem:[%s236] sm:$0x3]
        %v287 = vxor.u32 %v286, 2147483648
        %v288 = vmul.f32 %v287, 1.442695
        %v289 = vpow.pop %v288
        %v290 = vadd.f32 %v289, 1.0
        %v291 = vrcp.pop %v290
        %v292 = vmul.f32 1.0, %v291
        %v293 = vld [vmem:[%s245] sm:$0x3]
        %v294 = vld [vmem:[%s269] sm:$0x1]
        %v295 = vmul.f32 %v292, %v293
        %vm296 = vcmask 1041408
        %v297 = vsel %vm296, %v295, 0.0
        %v298 = vrot.slane %v297, 4
        %v299 = vadd.f32 %v297, %v298
        %v300 = vrot.slane %v299, 2
        %v301 = vadd.f32 %v299, %v300
        %v302 = vrot.slane %v301, 1
        %v303 = vadd.f32 %v301, %v302
        %v304 = vadd.f32 %v294, %v303
        %305 = vst [vmem:[%s269] sm:$0x1] %v304
        %v306 = vld [vmem:[%s275] sm:$0x1]
        %v307 = vmul.f32 %v292, %v292
        %v308 = vmul.f32 %v293, %v293
        %v309 = vadd.f32 %v307, %v308
        %v310 = vsel %vm296, %v309, 0.0
        %v311 = vrot.slane %v310, 4
        %v312 = vadd.f32 %v310, %v311
        %v313 = vrot.slane %v312, 2
        %v314 = vadd.f32 %v312, %v313
        %v315 = vrot.slane %v314, 1
        %v316 = vadd.f32 %v314, %v315
        %v317 = vadd.f32 %v306, %v316
        %318 = vst [vmem:[%s275] sm:$0x1] %v317
        %s319 = sand.u32 %s123, 1
        %s320 = scalar_lea.sflag [#allocation6], %s319
        %s321 = sand.u32 %s123, 1
        %s322 = scalar_lea.vmem [#allocation9], %s321
        %s323 = sand.u32 %s149, 1
        %s324 = scalar_lea.sflag [#allocation11], %s323
        %s325 = sand.u32 %s149, 1
        %s326 = scalar_lea.vmem [#allocation10], %s325
        // Predicated region
        $region41: #{tpu_custom_call.1} parent=27 // pred_check
          %p327 = pneg %p133
        $region42: #{tpu_custom_call.1} parent=27 // pred_check_branch
          %329 = sbr.rel (%p327) target = $region44
        $region43: #{tpu_custom_call.1} parent=27 // pred_region
          %s331 = ssub.s32 16, 16
          %332 = vsyncadd %s320, %s331
          %s333 = smul.addr %s37, 16
          %s334 = scalar_lea.hbm %s3, %s333
          %s336 = sshll.u32 %s322, 4
          %s337 = int_to_ptr.vmem [resolvable:$true] %s336
          %339 = dma.vmem_to_hbm [thread:$0]  %s337, 16, %s334, %s320
        $region44: #{tpu_custom_call.1} parent=27 // pred_fallthru
          _
        // Predicated region
        $region45: #{tpu_custom_call.1} parent=27 // pred_check
          %p340 = pneg %p159
        $region46: #{tpu_custom_call.1} parent=27 // pred_check_branch
          %342 = sbr.rel (%p340) target = $region48
        $region47: #{tpu_custom_call.1} parent=27 // pred_region
          %s344 = ssub.s32 16, 16
          %345 = vsyncadd %s324, %s344
          %s346 = smul.addr %s37, 16
          %s347 = scalar_lea.hbm %s4, %s346
          %s349 = sshll.u32 %s326, 4
          %s350 = int_to_ptr.vmem [resolvable:$true] %s349
          %352 = dma.vmem_to_hbm [thread:$0]  %s350, 16, %s347, %s324
        $region48: #{tpu_custom_call.1} parent=27 // pred_fallthru
          _
      $region28: #{tpu_custom_call.1} parent=5 // pred_fallthru
        _
      %p353 = scmp.le.s32.totalorder 2, %s27
      // Predicated region
      $region49: #{tpu_custom_call.1} parent=5 // pred_check
        %p354 = pneg %p353
      $region50: #{tpu_custom_call.1} parent=5 // pred_check_branch
        %356 = sbr.rel (%p354) target = $region52
      $region51: #{tpu_custom_call.1} parent=5 // pred_region
        %s357 = ssub.s32 %s27, 2
        // Predicated region
        $region53: #{tpu_custom_call.1} parent=51 // pred_check
          %p358 = pneg %p139
        $region54: #{tpu_custom_call.1} parent=51 // pred_check_branch
          %360 = sbr.rel (%p358) target = $region56
        $region55: #{tpu_custom_call.1} parent=51 // pred_region
          %s361 = sand.u32 %s124, 1
          %s362 = scalar_lea.sflag [#allocation6], %s361
          %s363 = sand.u32 %s124, 1
          %s364 = scalar_lea.vmem [#allocation9], %s363
          %365 = dma.done %s362, 16
        $region56: #{tpu_custom_call.1} parent=51 // pred_fallthru
          _
        // Predicated region
        $region57: #{tpu_custom_call.1} parent=51 // pred_check
          %p366 = pneg %p165
        $region58: #{tpu_custom_call.1} parent=51 // pred_check_branch
          %368 = sbr.rel (%p366) target = $region60
        $region59: #{tpu_custom_call.1} parent=51 // pred_region
          %s369 = sand.u32 %s150, 1
          %s370 = scalar_lea.sflag [#allocation11], %s369
          %s371 = sand.u32 %s150, 1
          %s372 = scalar_lea.vmem [#allocation10], %s371
          %373 = dma.done %s370, 16
        $region60: #{tpu_custom_call.1} parent=51 // pred_fallthru
          _
      $region52: #{tpu_custom_call.1} parent=5 // pred_fallthru
        _
    $region6: #{tpu_custom_call.1} parent=1 // loop_footer
      %s31 = sadd.s32 1, %s27
    $region7: #{tpu_custom_call.1} parent=1 // loop_footer_branch
      %26 = sbr.rel target = $region3
    $region8: #{tpu_custom_call.1} parent=1 // loop_exit
      _
    %374 = vsyncpa [#allocation5], 1
    %s375 = scalar_lea.sflag [#allocation5], 1
    %376 = vsyncpa %s375, 1
    %377 = vsyncpa [#allocation8], 1
    %s378 = scalar_lea.sflag [#allocation8], 1
    %379 = vsyncpa %s378, 1
    %380 = vsyncpa [#allocation6], 1
    %s381 = scalar_lea.sflag [#allocation6], 1
    %382 = vsyncpa %s381, 1
    %383 = vsyncpa [#allocation11], 1
    %s384 = scalar_lea.sflag [#allocation11], 1
    %385 = vsyncpa %s384, 1

</llo_original>
